<compile_context>
chip_gen: v7x
topology: tpu7x:2x2x1
jax: 0.10.0
libtpu: 0.0.40
codegen_flags: <defaults>
</compile_context>

<pallas_src>
import functools

import jax
import jax.numpy as jnp
import numpy as np
from jax import lax
from jax.experimental import pallas as pl
from jax.experimental.pallas import tpu as pltpu

_LANE = 128


def _fold_to_lanes(x):
    """Tree-fold (rows, w) -> (rows, 128) with lane-aligned VPU adds only.

    Only called on small register-resident chunks (w <= chunk_w), never on a
    full input tile, so every temporary stays in vregs.
    """
    w = x.shape[-1]
    while w > _LANE:
        half = w // 2
        x = x[:, :half] + x[:, half:]
        w = half
    return x


def _tversky_partial_kernel(pred_ref, targ_ref, out_ref, sp_acc, st_acc, tp_acc,
                            *, m, tile_n, chunk_w, steps_per_split, rows,
                            need_mask, unroll):
    s = pl.program_id(0)   # TensorCore split ("parallel")
    k = pl.program_id(1)   # reduction step within the split ("arbitrary")
    n_chunks = tile_n // chunk_w

    @pl.when(k == 0)
    def _():
        sp_acc[...] = jnp.zeros_like(sp_acc)
        st_acc[...] = jnp.zeros_like(st_acc)
        tp_acc[...] = jnp.zeros_like(tp_acc)

    block_start = (s * steps_per_split + k) * tile_n
    valid = m - block_start   # valid lanes in this block (<= 0 for dup blocks)

    def accumulate(masked):
        def chunk_body(c, carry):
            sp, st, tp = carry
            off = pl.multiple_of(c * chunk_w, chunk_w)
            x = pred_ref[:, pl.ds(off, chunk_w)].astype(jnp.float32)
            t = targ_ref[:, pl.ds(off, chunk_w)].astype(jnp.float32)
            # Sigmoid = exp (EUP) + approximate reciprocal (EUP); the VALU only
            # sees the add/mul/where traffic.
            p = pl.reciprocal(1.0 + jnp.exp(-x), approx=True)
            if masked:
                lane = lax.broadcasted_iota(jnp.int32, (rows, chunk_w), 1) + off
                msk = lane < valid
                p = jnp.where(msk, p, 0.0)
                t = jnp.where(msk, t, 0.0)
            sp = sp + _fold_to_lanes(p)
            st = st + _fold_to_lanes(t)
            tp = tp + _fold_to_lanes(p * t)
            return (sp, st, tp)

        init = (sp_acc[...], st_acc[...], tp_acc[...])
        sp, st, tp = lax.fori_loop(0, n_chunks, chunk_body, init, unroll=unroll)
        # Accumulator refs are written exactly once per grid step.
        sp_acc[...] = sp
        st_acc[...] = st
        tp_acc[...] = tp

    if need_mask:
        is_full = valid >= tile_n

        @pl.when(is_full)
        def _():
            accumulate(False)      # interior blocks: no mask overhead

        @pl.when(jnp.logical_not(is_full))
        def _():
            accumulate(True)       # tail / clamped-duplicate blocks
    else:
        accumulate(False)

    # Finish the reduction in-kernel: cross-lane reduce on the (otherwise idle)
    # XLU so each split writes back only 3 * rows f32.
    @pl.when(k == pl.num_programs(1) - 1)
    def _():
        out_ref[0, :] = jnp.sum(sp_acc[...], axis=-1)
        out_ref[1, :] = jnp.sum(st_acc[...], axis=-1)
        out_ref[2, :] = jnp.sum(tp_acc[...], axis=-1)


def _chip_params():
    """Generation-aware VMEM budget / split count (v5e/v6e vs v7x)."""
    vmem_cap = 128 << 20
    try:
        info = pltpu.get_tpu_info()
        vmem_cap = int(getattr(info, "vmem_capacity_bytes", vmem_cap))
    except Exception:
        pass
    try:
        kind = jax.devices()[0].device_kind.lower()
    except Exception:
        kind = ""
    # v7x: two TensorCores per chip, 64 MiB VMEM per core.
    num_splits = 2 if ("v7" in kind or vmem_cap <= (64 << 20)) else 1
    per_block_budget = max(1 << 20, vmem_cap // 16)
    vmem_cap_limit = int(vmem_cap * 0.6)
    return per_block_budget, vmem_cap_limit, num_splits


def _row_split(b, n, pack):
    """Pick R so that b*R fills the native sublane packing and R divides N."""
    if b % pack == 0:
        return 1
    for r in (2, 4, 8, 16, 32):
        if n % r == 0 and (b * r) % pack == 0:
            return r
    for r in (32, 16, 8, 4, 2):
        if n % r == 0 and b * r >= pack:
            return r
    return 1


def _pick_tile(m, rows, itemsize, per_block_budget):
    """Largest 128 * 2**k lane tile fitting the per-input block budget."""
    max_by_budget = max(_LANE, per_block_budget // max(1, rows * itemsize))
    tile = _LANE
    while tile * 2 <= max_by_budget and tile < m:
        tile *= 2
    return tile


def _pick_chunk(tile_n, rows):
    """Chunk width so the per-chunk register working set is ~8 f32 vregs."""
    target_elems = 8 * 8 * _LANE
    cw = _LANE
    while cw * 2 <= tile_n and rows * (cw * 2) <= target_elems:
        cw *= 2
    return cw


def tversky_loss(pred, target, alpha=0.7, beta=0.3, smooth=1e-5,
                 per_block_budget_bytes=None, num_splits=None):
    """Pallas TPU implementation of TverskyLoss.forward (returns a scalar)."""
    assert pred.shape == target.shape
    b = pred.shape[0]
    n = int(np.prod(pred.shape[1:]))

    budget_default, vmem_cap_limit, splits_default = _chip_params()
    if per_block_budget_bytes is None:
        per_block_budget_bytes = budget_default
    if num_splits is None:
        num_splits = splits_default

    p_item = np.dtype(pred.dtype).itemsize
    t_item = np.dtype(target.dtype).itemsize
    pack = max(8, 32 // max(1, min(p_item, t_item)))   # 8 f32 / 16 bf16 / 32 int8

    r = _row_split(b, n, pack)
    rows = b * r
    m = n // r

    # Native dtype into the kernel (no wrapper upcast/copy); contiguous reshape.
    pred2 = pred.reshape(rows, m)
    targ2 = target.reshape(rows, m)

    tile_n = _pick_tile(m, rows, max(p_item, t_item), per_block_budget_bytes)
    chunk_w = _pick_chunk(tile_n, rows)
    n_chunks = tile_n // chunk_w
    unroll = n_chunks if n_chunks <= 8 else 8   # n_chunks is a power of two

    steps_total = pl.cdiv(m, tile_n)
    splits = num_splits if steps_total >= num_splits else 1
    steps_per_split = pl.cdiv(steps_total, splits)
    # Mask only if padded coverage (partial tail tile or clamped duplicate
    # blocks) exceeds the true row length; interior blocks skip the mask.
    need_mask = (splits * steps_per_split * tile_n) != m

    def in_index_map(s, k):
        blk = s * steps_per_split + k
        # Clamp duplicate/overhanging blocks to the last valid block; their
        # contribution is zeroed by the in-kernel mask.
        return (0, jnp.minimum(blk, steps_total - 1))

    out_spec = pl.BlockSpec((None, 3, rows), lambda s, k: (s, 0, 0))
    out_sds = jax.ShapeDtypeStruct((splits, 3, rows), jnp.float32)

    kernel = functools.partial(
        _tversky_partial_kernel,
        m=m, tile_n=tile_n, chunk_w=chunk_w, steps_per_split=steps_per_split,
        rows=rows, need_mask=need_mask, unroll=unroll)

    # VMEM budget: 2 inputs x 2 pipeline buffers x block + 3 accumulators +
    # double-buffered tiny output + margin (no large in-body intermediates).
    pred_block = rows * tile_n * p_item
    targ_block = rows * tile_n * t_item
    acc_bytes = 3 * rows * _LANE * 4
    out_bytes = 2 * splits * 3 * rows * 4
    vmem_need = 2 * (pred_block + targ_block) + acc_bytes + out_bytes + (1 << 20)
    vmem_limit = int(min(vmem_cap_limit, max(8 << 20, 2 * vmem_need)))

    partial = pl.pallas_call(
        kernel,
        out_shape=out_sds,
        grid_spec=pltpu.PrefetchScalarGridSpec(
            num_scalar_prefetch=0,
            grid=(splits, steps_per_split),
            in_specs=[
                pl.BlockSpec((rows, tile_n), in_index_map),
                pl.BlockSpec((rows, tile_n), in_index_map),
            ],
            out_specs=out_spec,
            scratch_shapes=[pltpu.VMEM((rows, _LANE), jnp.float32)] * 3,
        ),
        compiler_params=pltpu.CompilerParams(
            dimension_semantics=("parallel", "arbitrary"),
            vmem_limit_bytes=vmem_limit),
    )(pred2, targ2)

    # Tiny XLA epilogue: fold splits + row groups, then the Tversky ratio.
    sums = partial.sum(axis=0).reshape(3, b, r).sum(axis=2)   # (3, b)
    sum_p, sum_t, tp_b = sums[0], sums[1], sums[2]
    fp_b = sum_p - tp_b          # sum(p * (1 - t))
    fn_b = sum_t - tp_b          # sum((1 - p) * t)
    tversky = (tp_b + smooth) / (tp_b + alpha * fp_b + beta * fn_b + smooth)
    return 1.0 - jnp.mean(tversky)


def _reference_loss(pred, target, alpha=0.7, beta=0.3, smooth=1e-5):
    p = jax.nn.sigmoid(pred.astype(jnp.float32))
    t = target.astype(jnp.float32)
    axes = tuple(range(1, p.ndim))
    tp = jnp.sum(p * t, axis=axes)
    fp = jnp.sum(p * (1.0 - t), axis=axes)
    fn = jnp.sum((1.0 - p) * t, axis=axes)
    tversky = (tp + smooth) / (tp + alpha * fp + beta * fn + smooth)
    return 1.0 - jnp.mean(tversky)


if __name__ == "__main__":
    key = jax.random.PRNGKey(0)
    k1, k2, k3, k4 = jax.random.split(key, 4)

    # Tolerance accounts for pl.reciprocal(approx=True) in the in-kernel
    # sigmoid (per-element deviation ~1e-4, largely cancelling in the sums);
    # masking/indexing bugs would be orders of magnitude larger.
    TOL = 1e-3

    # Primary case from the module spec: NCHW = (2, 4, 16, 16).
    B, C, H, W = 2, 4, 16, 16
    pred = jax.random.normal(k1, (B, C, H, W), dtype=jnp.float32)
    target = (jax.random.uniform(k2, (B, C, H, W)) > 0.5).astype(jnp.float32)

    loss = jax.block_until_ready(tversky_loss(pred, target))
    ref = jax.block_until_ready(_reference_loss(pred, target))
    assert jnp.allclose(loss, ref, atol=TOL, rtol=TOL), (loss, ref)

    # Ragged case exercising the in-kernel tail mask (N not a tile multiple).
    B2, C2, H2, W2 = 2, 3, 17, 19
    pred2 = jax.random.normal(k3, (B2, C2, H2, W2), dtype=jnp.float32)
    target2 = (jax.random.uniform(k4, (B2, C2, H2, W2)) > 0.5).astype(jnp.float32)

    loss2 = jax.block_until_ready(tversky_loss(pred2, target2))
    ref2 = jax.block_until_ready(_reference_loss(pred2, target2))
    assert jnp.allclose(loss2, ref2, atol=TOL, rtol=TOL), (loss2, ref2)

    print("KERNEL_OK")
</pallas_src>

<mosaic_0001>
module attributes {stable_mosaic.version = 11 : i64} {
  func.func @_tversky_partial_kernel(%arg0: i32, %arg1: i32, %arg2: memref<8x256xf32, #tpu.memory_space<vmem>>, %arg3: memref<8x256xf32, #tpu.memory_space<vmem>>, %arg4: memref<1x3x8xf32, #tpu.memory_space<vmem>>, %arg5: memref<8x128xf32, #tpu.memory_space<vmem>>, %arg6: memref<8x128xf32, #tpu.memory_space<vmem>>, %arg7: memref<8x128xf32, #tpu.memory_space<vmem>>) attributes {dimension_semantics = [#tpu.dimension_semantics<parallel>, #tpu.dimension_semantics<arbitrary>], iteration_bounds = array<i64: 1, 1>, scalar_prefetch = 0 : i64, scratch_operands = 3 : i64, tpu.core_type = #tpu.core_type<tc>, window_params = [{transform_indices = @transform_0, window_bounds = array<i64: 8, 256>}, {transform_indices = @transform_1, window_bounds = array<i64: 8, 256>}, {transform_indices = @transform_2, window_bounds = array<i64: 1, 3, 8>}]} {
    %c0_i32 = arith.constant 0 : i32
    %0 = arith.cmpi eq, %arg1, %c0_i32 : i32
    %1 = arith.extui %0 : i1 to i32
    %c0_i32_0 = arith.constant 0 : i32
    %2 = arith.cmpi ne, %1, %c0_i32_0 : i32
    scf.if %2 {
      %cst_18 = arith.constant 0.000000e+00 : f32
      %37 = vector.broadcast %cst_18 : f32 to vector<8x128xf32>
      %c0_19 = arith.constant 0 : index
      %c0_20 = arith.constant 0 : index
      %38 = vector.load %arg5[%c0_19, %c0_20] : memref<8x128xf32, #tpu.memory_space<vmem>>, vector<8x128xf32>
      tpu.vector_store %arg5[%c0_19, %c0_20], %37 {strides = array<i32>} : memref<8x128xf32, #tpu.memory_space<vmem>>, vector<8x128xf32>,
      %cst_21 = arith.constant 0.000000e+00 : f32
      %39 = vector.broadcast %cst_21 : f32 to vector<8x128xf32>
      %c0_22 = arith.constant 0 : index
      %c0_23 = arith.constant 0 : index
      %40 = vector.load %arg6[%c0_22, %c0_23] : memref<8x128xf32, #tpu.memory_space<vmem>>, vector<8x128xf32>
      tpu.vector_store %arg6[%c0_22, %c0_23], %39 {strides = array<i32>} : memref<8x128xf32, #tpu.memory_space<vmem>>, vector<8x128xf32>,
      %cst_24 = arith.constant 0.000000e+00 : f32
      %41 = vector.broadcast %cst_24 : f32 to vector<8x128xf32>
      %c0_25 = arith.constant 0 : index
      %c0_26 = arith.constant 0 : index
      %42 = vector.load %arg7[%c0_25, %c0_26] : memref<8x128xf32, #tpu.memory_space<vmem>>, vector<8x128xf32>
      tpu.vector_store %arg7[%c0_25, %c0_26], %41 {strides = array<i32>} : memref<8x128xf32, #tpu.memory_space<vmem>>, vector<8x128xf32>,
    } else {
    }
    %c0 = arith.constant 0 : index
    %c0_1 = arith.constant 0 : index
    %3 = vector.load %arg5[%c0, %c0_1] : memref<8x128xf32, #tpu.memory_space<vmem>>, vector<8x128xf32>
    %c0_2 = arith.constant 0 : index
    %c0_3 = arith.constant 0 : index
    %4 = vector.load %arg6[%c0_2, %c0_3] : memref<8x128xf32, #tpu.memory_space<vmem>>, vector<8x128xf32>
    %c0_4 = arith.constant 0 : index
    %c0_5 = arith.constant 0 : index
    %5 = vector.load %arg7[%c0_4, %c0_5] : memref<8x128xf32, #tpu.memory_space<vmem>>, vector<8x128xf32>
    %c0_i32_6 = arith.constant 0 : i32
    %c256_i32 = arith.constant 256 : i32
    %6 = arith.muli %c0_i32_6, %c256_i32 : i32
    %7 = tpu.assume_multiple %6, 256 : i32
    %c0_7 = arith.constant 0 : index
    %8 = arith.index_cast %7 : i32 to index
    %9 = vector.load %arg2[%c0_7, %8] : memref<8x256xf32, #tpu.memory_space<vmem>>, vector<8x256xf32>
    %c0_8 = arith.constant 0 : index
    %10 = arith.index_cast %7 : i32 to index
    %11 = vector.load %arg3[%c0_8, %10] : memref<8x256xf32, #tpu.memory_space<vmem>>, vector<8x256xf32>
    %cst = arith.constant 0.000000e+00 : f32
    %12 = vector.broadcast %cst : f32 to vector<8x256xf32>
    %13 = arith.subf %12, %9 : vector<8x256xf32>
    %14 = math.exp %13 : vector<8x256xf32>
    %cst_9 = arith.constant 1.000000e+00 : f32
    %15 = vector.broadcast %cst_9 : f32 to vector<8x256xf32>
    %16 = arith.addf %15, %14 : vector<8x256xf32>
    %17 = tpu.reciprocal %16 {approx = true} : vector<8x256xf32> -> vector<8x256xf32>
    %18 = vector.extract_strided_slice %17 {offsets = [0, 0], sizes = [8, 128], strides = [1, 1]} : vector<8x256xf32> to vector<8x128xf32>
    %19 = vector.extract_strided_slice %17 {offsets = [0, 128], sizes = [8, 128], strides = [1, 1]} : vector<8x256xf32> to vector<8x128xf32>
    %20 = arith.addf %18, %19 : vector<8x128xf32>
    %21 = arith.addf %3, %20 : vector<8x128xf32>
    %22 = vector.extract_strided_slice %11 {offsets = [0, 0], sizes = [8, 128], strides = [1, 1]} : vector<8x256xf32> to vector<8x128xf32>
    %23 = vector.extract_strided_slice %11 {offsets = [0, 128], sizes = [8, 128], strides = [1, 1]} : vector<8x256xf32> to vector<8x128xf32>
    %24 = arith.addf %22, %23 : vector<8x128xf32>
    %25 = arith.addf %4, %24 : vector<8x128xf32>
    %26 = arith.mulf %17, %11 : vector<8x256xf32>
    %27 = vector.extract_strided_slice %26 {offsets = [0, 0], sizes = [8, 128], strides = [1, 1]} : vector<8x256xf32> to vector<8x128xf32>
    %28 = vector.extract_strided_slice %26 {offsets = [0, 128], sizes = [8, 128], strides = [1, 1]} : vector<8x256xf32> to vector<8x128xf32>
    %29 = arith.addf %27, %28 : vector<8x128xf32>
    %30 = arith.addf %5, %29 : vector<8x128xf32>
    %c1_i32 = arith.constant 1 : i32
    %c0_10 = arith.constant 0 : index
    %c0_11 = arith.constant 0 : index
    %31 = vector.load %arg5[%c0_10, %c0_11] : memref<8x128xf32, #tpu.memory_space<vmem>>, vector<8x128xf32>
    tpu.vector_store %arg5[%c0_10, %c0_11], %21 {strides = array<i32>} : memref<8x128xf32, #tpu.memory_space<vmem>>, vector<8x128xf32>,
    %c0_12 = arith.constant 0 : index
    %c0_13 = arith.constant 0 : index
    %32 = vector.load %arg6[%c0_12, %c0_13] : memref<8x128xf32, #tpu.memory_space<vmem>>, vector<8x128xf32>
    tpu.vector_store %arg6[%c0_12, %c0_13], %25 {strides = array<i32>} : memref<8x128xf32, #tpu.memory_space<vmem>>, vector<8x128xf32>,
    %c0_14 = arith.constant 0 : index
    %c0_15 = arith.constant 0 : index
    %33 = vector.load %arg7[%c0_14, %c0_15] : memref<8x128xf32, #tpu.memory_space<vmem>>, vector<8x128xf32>
    tpu.vector_store %arg7[%c0_14, %c0_15], %30 {strides = array<i32>} : memref<8x128xf32, #tpu.memory_space<vmem>>, vector<8x128xf32>,
    %c0_i32_16 = arith.constant 0 : i32
    %34 = arith.cmpi eq, %arg1, %c0_i32_16 : i32
    %35 = arith.extui %34 : i1 to i32
    %c0_i32_17 = arith.constant 0 : i32
    %36 = arith.cmpi ne, %35, %c0_i32_17 : i32
    scf.if %36 {
      %c0_18 = arith.constant 0 : index
      %c0_19 = arith.constant 0 : index
      %37 = vector.load %arg5[%c0_18, %c0_19] : memref<8x128xf32, #tpu.memory_space<vmem>>, vector<8x128xf32>
      %cst_20 = arith.constant dense<0.000000e+00> : vector<8xf32>
      %38 = vector.multi_reduction <add>, %37, %cst_20 [1] : vector<8x128xf32> to vector<8xf32>
      %c0_21 = arith.constant 0 : index
      %c0_22 = arith.constant 0 : index
      %c0_23 = arith.constant 0 : index
      %39 = vector.load %arg4[%c0_21, %c0_22, %c0_23] : memref<1x3x8xf32, #tpu.memory_space<vmem>>, vector<1x1x8xf32>
      %40 = vector.shape_cast %39 : vector<1x1x8xf32> to vector<8xf32>
      %41 = vector.shape_cast %38 : vector<8xf32> to vector<1x1x8xf32>
      tpu.vector_store %arg4[%c0_21, %c0_22, %c0_23], %41 {strides = array<i32>} : memref<1x3x8xf32, #tpu.memory_space<vmem>>, vector<1x1x8xf32>,
      %c0_24 = arith.constant 0 : index
      %c0_25 = arith.constant 0 : index
      %42 = vector.load %arg6[%c0_24, %c0_25] : memref<8x128xf32, #tpu.memory_space<vmem>>, vector<8x128xf32>
      %cst_26 = arith.constant dense<0.000000e+00> : vector<8xf32>
      %43 = vector.multi_reduction <add>, %42, %cst_26 [1] : vector<8x128xf32> to vector<8xf32>
      %c0_27 = arith.constant 0 : index
      %c1 = arith.constant 1 : index
      %c0_28 = arith.constant 0 : index
      %44 = vector.load %arg4[%c0_27, %c1, %c0_28] : memref<1x3x8xf32, #tpu.memory_space<vmem>>, vector<1x1x8xf32>
      %45 = vector.shape_cast %44 : vector<1x1x8xf32> to vector<8xf32>
      %46 = vector.shape_cast %43 : vector<8xf32> to vector<1x1x8xf32>
      tpu.vector_store %arg4[%c0_27, %c1, %c0_28], %46 {strides = array<i32>} : memref<1x3x8xf32, #tpu.memory_space<vmem>>, vector<1x1x8xf32>,
      %c0_29 = arith.constant 0 : index
      %c0_30 = arith.constant 0 : index
      %47 = vector.load %arg7[%c0_29, %c0_30] : memref<8x128xf32, #tpu.memory_space<vmem>>, vector<8x128xf32>
      %cst_31 = arith.constant dense<0.000000e+00> : vector<8xf32>
      %48 = vector.multi_reduction <add>, %47, %cst_31 [1] : vector<8x128xf32> to vector<8xf32>
      %c0_32 = arith.constant 0 : index
      %c2 = arith.constant 2 : index
      %c0_33 = arith.constant 0 : index
      %49 = vector.load %arg4[%c0_32, %c2, %c0_33] : memref<1x3x8xf32, #tpu.memory_space<vmem>>, vector<1x1x8xf32>
      %50 = vector.shape_cast %49 : vector<1x1x8xf32> to vector<8xf32>
      %51 = vector.shape_cast %48 : vector<8xf32> to vector<1x1x8xf32>
      tpu.vector_store %arg4[%c0_32, %c2, %c0_33], %51 {strides = array<i32>} : memref<1x3x8xf32, #tpu.memory_space<vmem>>, vector<1x1x8xf32>,
    } else {
    }
    return
  }
  func.func @transform_0(%arg0: i32, %arg1: i32) -> (i32, i32) {
    %c1_i32 = arith.constant 1 : i32
    %0 = arith.muli %arg0, %c1_i32 : i32
    %1 = arith.addi %0, %arg1 : i32
    %c0_i32 = arith.constant 0 : i32
    %2 = arith.minsi %1, %c0_i32 : i32
    %c0_i32_0 = arith.constant 0 : i32
    %c0_i32_1 = arith.constant 0 : i32
    return %c0_i32_0, %2 : i32, i32
  }
  func.func @transform_1(%arg0: i32, %arg1: i32) -> (i32, i32) {
    %c1_i32 = arith.constant 1 : i32
    %0 = arith.muli %arg0, %c1_i32 : i32
    %1 = arith.addi %0, %arg1 : i32
    %c0_i32 = arith.constant 0 : i32
    %2 = arith.minsi %1, %c0_i32 : i32
    %c0_i32_0 = arith.constant 0 : i32
    %c0_i32_1 = arith.constant 0 : i32
    return %c0_i32_0, %2 : i32, i32
  }
  func.func @transform_2(%arg0: i32, %arg1: i32) -> (i32, i32, i32) {
    %c0_i32 = arith.constant 0 : i32
    %c0_i32_0 = arith.constant 0 : i32
    %c0_i32_1 = arith.constant 0 : i32
    return %arg0, %c0_i32, %c0_i32_0 : i32, i32, i32
  }
}

</mosaic_0001>

<llo_original>
// kernel: tpu_custom_call.1
$region0: #{tpu_custom_call.1}
  #allocation0 [shape = 'u32[]', space=smem, size = 0x4, offset = 0x4, fixed_abs, tag = 'smem constant byte address 0x4 - core index']
  #allocation1 [shape = 'u32[144,128]{1,0:T(1,128)}', space=vmem, size = 0x12000, scoped, tag = 'internal scratch']
  #allocation2 [shape = 'f32[8,128]{1,0:T(8,128)}', space=vmem, size = 0x1000, scoped, tag = 'scratch operand']
  #allocation3 [shape = 'f32[8,128]{1,0:T(8,128)}', space=vmem, size = 0x1000, scoped, tag = 'scratch operand']
  #allocation4 [shape = 'f32[8,128]{1,0:T(8,128)}', space=vmem, size = 0x1000, scoped, tag = 'scratch operand']
  %s0 = inlined_call_operand.hbm [shape: f32[8,256], index: 0, kind: input, shape index: {}]
  %s1 = inlined_call_operand.hbm [shape: f32[8,256], index: 1, kind: input, shape index: {}]
  %s2 = inlined_call_operand.vmem [shape: f32[1,3,8], index: 2, kind: output, shape index: {}]
  %s3 = sld [smem:[#allocation0]]
  $region34: #{tpu_custom_call.1} parent=0
    _
  %s5 = ssub.s32 1, %s3
  %s6 = scalar_select 0, %s5, %s3
  $region1: #{tpu_custom_call.1} parent=0
    #allocation5 [shape = 'u8[8192]{0}', space=vmem, size = 0x2000, scoped, tag = 'input window, operand 0, single buffered']
    #allocation6 [shape = 's32[1]{0}', space=sflag, size = 0x4, scoped, tag = 'scoped memory for tpu_custom_call.1']
    #allocation7 [shape = 'u8[8192]{0}', space=vmem, size = 0x2000, scoped, tag = 'input window, operand 1, single buffered']
    #allocation8 [shape = 's32[1]{0}', space=sflag, size = 0x4, scoped, tag = 'scoped memory for tpu_custom_call.1']
    %7 = vsyncpa [#allocation6], 0
    %8 = vsyncpa [#allocation8], 0
    // Predicated region
    $region2: #{tpu_custom_call.1} parent=1 // pred_check
      _
    $region3: #{tpu_custom_call.1} parent=1 // pred_check_branch
      %10 = sbr.rel (0) target = $region5
    $region4: #{tpu_custom_call.1} parent=1 // pred_region
      %s11 = sadd.s32 0, 0
      %p12 = scmp.lt.s32.totalorder %s11, 0
      %s13 = scalar_select %p12, %s11, 0
      %s14 = smul.u32 2, %s13
      %s16 = ssub.s32 256, 256
      %17 = vsyncadd [#allocation6], %s16
      %s18 = smul.addr %s14, 128
      %s19 = scalar_lea.hbm %s0, %s18
      %s21 = sshll.u32 [#allocation5], 4
      %s22 = int_to_ptr.vmem [resolvable:$true] %s21
      %24 = dma.hbm_to_vmem [thread:$0]  %s19, 256, %s22, [#allocation6]
    $region5: #{tpu_custom_call.1} parent=1 // pred_fallthru
      _
    // Predicated region
    $region6: #{tpu_custom_call.1} parent=1 // pred_check
      _
    $region7: #{tpu_custom_call.1} parent=1 // pred_check_branch
      %26 = sbr.rel (0) target = $region9
    $region8: #{tpu_custom_call.1} parent=1 // pred_region
      %s27 = sadd.s32 0, 0
      %p28 = scmp.lt.s32.totalorder %s27, 0
      %s29 = scalar_select %p28, %s27, 0
      %s30 = smul.u32 2, %s29
      %s32 = ssub.s32 256, 256
      %33 = vsyncadd [#allocation8], %s32
      %s34 = smul.addr %s30, 128
      %s35 = scalar_lea.hbm %s1, %s34
      %s37 = sshll.u32 [#allocation7], 4
      %s38 = int_to_ptr.vmem [resolvable:$true] %s37
      %40 = dma.hbm_to_vmem [thread:$0]  %s35, 256, %s38, [#allocation8]
    $region9: #{tpu_custom_call.1} parent=1 // pred_fallthru
      _
    // Predicated region
    $region10: #{tpu_custom_call.1} parent=1 // pred_check
      _
    $region11: #{tpu_custom_call.1} parent=1 // pred_check_branch
      %42 = sbr.rel (0) target = $region13
    $region12: #{tpu_custom_call.1} parent=1 // pred_region
      %43 = dma.done [#allocation6], 256
    $region13: #{tpu_custom_call.1} parent=1 // pred_fallthru
      _
    // Predicated region
    $region14: #{tpu_custom_call.1} parent=1 // pred_check
      _
    $region15: #{tpu_custom_call.1} parent=1 // pred_check_branch
      %45 = sbr.rel (0) target = $region17
    $region16: #{tpu_custom_call.1} parent=1 // pred_region
      %46 = dma.done [#allocation8], 256
    $region17: #{tpu_custom_call.1} parent=1 // pred_fallthru
      _
    %s47 = sadd.s32 0, 0
    %p48 = scmp.lt.s32.totalorder %s47, 0
    %s49 = scalar_select %p48, %s47, 0
    %s50 = smul.u32 2, %s49
    %s51 = sadd.s32 0, 0
    %p52 = scmp.lt.s32.totalorder %s51, 0
    %s53 = scalar_select %p52, %s51, 0
    %s54 = smul.u32 2, %s53
    %p55 = scmp.eq.s32.totalorder 0, 0
    // Predicated region
    $region18: #{tpu_custom_call.1} parent=1 // pred_check
      %p56 = pneg %p55
    $region19: #{tpu_custom_call.1} parent=1 // pred_check_branch
      %58 = sbr.rel (%p56) target = $region21
    $region20: #{tpu_custom_call.1} parent=1 // pred_region
      %59 = vst [vmem:[#allocation2] sm:$0xff] 0.0
      %60 = vst [vmem:[#allocation3] sm:$0xff] 0.0
      %61 = vst [vmem:[#allocation4] sm:$0xff] 0.0
    $region21: #{tpu_custom_call.1} parent=1 // pred_fallthru
      _
    %v62 = vld [vmem:[#allocation2] sm:$0xff]
    %v63 = vld [vmem:[#allocation3] sm:$0xff]
    %v64 = vld [vmem:[#allocation4] sm:$0xff]
    %v65 = vld [vmem:[#allocation5] sm:$0xff]
    %v66 = vld [vmem:[#allocation5 + $0x8] sm:$0xff]
    %v67 = vld [vmem:[#allocation7] sm:$0xff]
    %v68 = vld [vmem:[#allocation7 + $0x8] sm:$0xff]
    %v69 = vsub.f32 0.0, %v65
    %v70 = vsub.f32 0.0, %v66
    %v71 = vmul.f32 %v69, 1.442695
    %v72 = vpow.pop %v71
    %v73 = vmul.f32 %v70, 1.442695
    %v74 = vpow.pop %v73
    %v75 = vadd.f32 %v72, 1.0
    %v76 = vadd.f32 %v74, 1.0
    %v77 = vrcp.pop %v75
    %v78 = vrcp.pop %v76
    %v79 = vadd.f32 %v77, %v78
    %v80 = vadd.f32 %v62, %v79
    %v81 = vadd.f32 %v67, %v68
    %v82 = vadd.f32 %v63, %v81
    %v83 = vmul.f32 %v77, %v67
    %v84 = vmul.f32 %v78, %v68
    %v85 = vadd.f32 %v83, %v84
    %v86 = vadd.f32 %v64, %v85
    %87 = vst [vmem:[#allocation2] sm:$0xff] %v80
    %88 = vst [vmem:[#allocation3] sm:$0xff] %v82
    %89 = vst [vmem:[#allocation4] sm:$0xff] %v86
    // Predicated region
    $region22: #{tpu_custom_call.1} parent=1 // pred_check
      %p90 = pneg %p55
    $region23: #{tpu_custom_call.1} parent=1 // pred_check_branch
      %92 = sbr.rel (%p90) target = $region25
    $region24: #{tpu_custom_call.1} parent=1 // pred_region
      %v93 = vld [vmem:[#allocation2] sm:$0xff]
      %94 = vadd.xlane.f32.xlu0 %v93
      %v95 = vpop.xlane.xlu0 %94
      %v97 = vlaneseq
      %v98 = vand.u32 %v97, 127
      %v99 = vlaneseq
      %v100 = vshrl.u32 %v99, 7
      %v101 = vsub.s32 %v98, %v100
      %v102 = vrot.slane %v95, %v101
      %vm104 = vcmask 57344
      %105 = vst.msk [vmem:[%s2] sm:$0x1] %vm104, %v102
      %v106 = vld [vmem:[#allocation3] sm:$0xff]
      %107 = vadd.xlane.f32.xlu0 %v106
      %v108 = vpop.xlane.xlu0 %107
      %v110 = vlaneseq
      %v111 = vshrl.u32 %v110, 7
      %v112 = vsub.s32 %v98, %v111
      %v113 = vrot.slane %v108, %v112
      %115 = vst.msk [vmem:[%s2 + $0x1] sm:$0x1] %vm104, %v113
      %v116 = vld [vmem:[#allocation4] sm:$0xff]
      %117 = vadd.xlane.f32.xlu0 %v116
      %v118 = vpop.xlane.xlu0 %117
      %v120 = vlaneseq
      %v121 = vshrl.u32 %v120, 7
      %v122 = vsub.s32 %v98, %v121
      %v123 = vrot.slane %v118, %v122
      %125 = vst.msk [vmem:[%s2 + $0x2] sm:$0x1] %vm104, %v123
    $region25: #{tpu_custom_call.1} parent=1 // pred_fallthru
      _
    // Predicated region
    $region26: #{tpu_custom_call.1} parent=1 // pred_check
      _
    $region27: #{tpu_custom_call.1} parent=1 // pred_check_branch
      %127 = sbr.rel (0) target = $region29
    $region28: #{tpu_custom_call.1} parent=1 // pred_region
      _
    $region29: #{tpu_custom_call.1} parent=1 // pred_fallthru
      _
    // Predicated region
    $region30: #{tpu_custom_call.1} parent=1 // pred_check
      _
    $region31: #{tpu_custom_call.1} parent=1 // pred_check_branch
      %129 = sbr.rel (0) target = $region33
    $region32: #{tpu_custom_call.1} parent=1 // pred_region
      _
    $region33: #{tpu_custom_call.1} parent=1 // pred_fallthru
      _
    %130 = vsyncpa [#allocation6], 1
    %131 = vsyncpa [#allocation8], 1

</llo_original>
